<compile_context>
chip_gen: v7x
topology: tpu7x:2x2x1
jax: 0.10.0
libtpu: 0.0.40
codegen_flags: <defaults>
</compile_context>

<pallas_src>
import jax
import jax.numpy as jnp
from jax import lax
from jax.experimental import pallas as pl
from jax.experimental.pallas import tpu as pltpu

BN_EPS = 1e-5


def _make_kernel(ker, Wp, L, F, pool):
    """Fused conv(k) + BN + ReLU (+ 2x2 max-pool) for one sample.

    x_ref     : (1, Cin, F2)  bf16 — zero-padded input, padded (H, W) flattened
                into the lane axis with row stride Wp.
    w_ref     : (ker*ker, Cout, Cin) bf16 — per-tap weight matrices.
    scale_ref : (Cout, 1) f32 — folded BN scale.
    shift_ref : (Cout, 1) f32 — folded BN shift (includes conv bias).
    o_ref     : (1, Cout, F) f32 — conv/pool map in flat (h*Wp + w) layout.
    """

    def kernel(x_ref, w_ref, scale_ref, shift_ref, o_ref):
        acc = None
        for ky in range(ker):
            for kx in range(ker):
                off = ky * Wp + kx
                rhs = x_ref[0, :, off:off + L]                 # (Cin, L) bf16
                tap = jnp.dot(w_ref[ky * ker + kx], rhs,
                              preferred_element_type=jnp.float32)
                acc = tap if acc is None else acc + tap        # (Cout, L) f32
        # Folded BatchNorm (eval) + ReLU, in f32.
        y = jnp.maximum(acc * scale_ref[...] + shift_ref[...], 0.0)
        if pool:
            # 2x2 max over (h,w),(h,w+1),(h+1,w),(h+1,w+1) computed at every
            # flat position via four contiguous lane-offset slices; the wrapper
            # keeps only even-h / even-w lanes (PyTorch floor mode).
            y = jnp.maximum(
                jnp.maximum(y[:, :F], y[:, 1:F + 1]),
                jnp.maximum(y[:, Wp:F + Wp], y[:, Wp + 1:F + Wp + 1]))
        o_ref[0] = y.astype(o_ref.dtype)

    return kernel


def conv_unit_forward(x_nchw, params, *, ker=3, max_pull=False):
    """Pallas TPU implementation of ConvUnit.forward.  x_nchw: (N, Cin, H, W) f32."""
    w_oihw, b, gamma, beta, rmean, rvar = params
    N, Cin, H, W = x_nchw.shape
    Cout = w_oihw.shape[0]
    pad = ker // 2
    Wp = W + 2 * pad
    F = H * Wp                                   # conv-output lanes kept per sample
    L = F + (Wp + 1 if max_pull else 0)          # conv-output lanes computed in-kernel
    max_off = (ker - 1) * (Wp + 1)               # largest tap lane offset
    rows = -(-(max_off + L) // Wp)               # padded rows needed (ceil)
    pad_bottom = rows - H - pad                  # extra bottom rows (garbage cols only)
    F2 = rows * Wp

    # Fold eval-mode BatchNorm + conv bias into per-channel scale / shift (f32).
    scale = (gamma / jnp.sqrt(rvar + BN_EPS)).astype(jnp.float32)
    shift = ((b - rmean) * scale + beta).astype(jnp.float32)

    # bf16 MXU operands; accumulation stays f32 inside the kernel.
    xp = jnp.pad(x_nchw.astype(jnp.bfloat16),
                 ((0, 0), (0, 0), (pad, pad_bottom), (pad, pad)))
    x_flat = xp.reshape(N, Cin, F2)
    # OIHW -> (ky*ker + kx, Cout, Cin) per-tap matrices.
    w_taps = jnp.transpose(w_oihw, (2, 3, 0, 1)).reshape(ker * ker, Cout, Cin)
    w_taps = w_taps.astype(jnp.bfloat16)

    kernel = _make_kernel(ker, Wp, L, F, max_pull)
    out_flat = pl.pallas_call(
        kernel,
        out_shape=jax.ShapeDtypeStruct((N, Cout, F), jnp.float32),
        grid=(N,),
        in_specs=[
            # Per-sample padded tile (auto double-buffered by the pipeline).
            pl.BlockSpec((1, Cin, F2), lambda n: (n, 0, 0)),
            # Weights / scale / shift: constant index_map -> stay resident in
            # VMEM, not re-DMA'd between grid steps.
            pl.BlockSpec((ker * ker, Cout, Cin), lambda n: (0, 0, 0)),
            pl.BlockSpec((Cout, 1), lambda n: (0, 0)),
            pl.BlockSpec((Cout, 1), lambda n: (0, 0)),
        ],
        out_specs=pl.BlockSpec((1, Cout, F), lambda n: (n, 0, 0)),
        compiler_params=pltpu.CompilerParams(
            dimension_semantics=("parallel",)),
    )(x_flat, w_taps, scale.reshape(Cout, 1), shift.reshape(Cout, 1))

    # Free reshape back to (N, Cout, H, Wp); crop the Wp-W padding columns
    # (and for max-pool keep every other row/column — PyTorch floor mode).
    out = out_flat.reshape(N, Cout, H, Wp)
    if max_pull:
        return out[:, :, :2 * (H // 2):2, :2 * (W // 2):2]
    return out[:, :, :, :W]


def conv_unit_reference(x_nchw, params, *, ker=3, max_pull=False):
    """Plain-JAX reference (matches PyTorch eval-mode semantics)."""
    w_oihw, b, gamma, beta, rmean, rvar = params
    pad = ker // 2
    conv = lax.conv_general_dilated(
        x_nchw, w_oihw, window_strides=(1, 1),
        padding=((pad, pad), (pad, pad)),
        dimension_numbers=('NCHW', 'OIHW', 'NCHW'),
        precision=lax.Precision.HIGHEST)
    conv = conv + b[None, :, None, None]
    y = (gamma[None, :, None, None] * (conv - rmean[None, :, None, None])
         / jnp.sqrt(rvar[None, :, None, None] + BN_EPS)
         + beta[None, :, None, None])
    y = jnp.maximum(y, 0.0)
    if max_pull:
        N, C, H, W = y.shape
        y = jnp.max(y.reshape(N, C, H // 2, 2, W // 2, 2), axis=(3, 5))
    return y


if __name__ == "__main__":
    N, Cin, Cout, H, W, ker = 2, 4, 8, 16, 16, 3

    key = jax.random.PRNGKey(0)
    ks = jax.random.split(key, 7)
    # x and w are rounded to bf16-representable values so the f32 reference and
    # the bf16-fed MXU see identical inputs (the kernel accumulates in f32);
    # BN parameters stay plain f32.
    x = jax.random.normal(ks[0], (N, Cin, H, W), jnp.float32)
    x = x.astype(jnp.bfloat16).astype(jnp.float32)
    w = jax.random.normal(ks[1], (Cout, Cin, ker, ker), jnp.float32) * 0.2
    w = w.astype(jnp.bfloat16).astype(jnp.float32)
    b = jax.random.normal(ks[2], (Cout,), jnp.float32) * 0.1
    gamma = jax.random.uniform(ks[3], (Cout,), jnp.float32, minval=0.5, maxval=1.5)
    beta = jax.random.normal(ks[4], (Cout,), jnp.float32) * 0.1
    rmean = jax.random.normal(ks[5], (Cout,), jnp.float32) * 0.1
    rvar = jax.random.uniform(ks[6], (Cout,), jnp.float32, minval=0.5, maxval=1.5)
    params = (w, b, gamma, beta, rmean, rvar)

    for max_pull in (False, True):
        out = jax.block_until_ready(
            conv_unit_forward(x, params, ker=ker, max_pull=max_pull))
        ref = conv_unit_reference(x, params, ker=ker, max_pull=max_pull)
        assert out.shape == ref.shape, (out.shape, ref.shape)
        max_err = float(jnp.max(jnp.abs(out - ref)))
        assert jnp.allclose(out, ref, atol=1e-3, rtol=1e-3), (
            f"mismatch (max_pull={max_pull}): max_abs_err={max_err}")

    print("KERNEL_OK")
</pallas_src>

<mosaic_0001>
module attributes {stable_mosaic.version = 11 : i64} {
  func.func @kernel(%arg0: i32, %arg1: memref<1x4x342xbf16, #tpu.memory_space<vmem>>, %arg2: memref<9x8x4xbf16, #tpu.memory_space<vmem>>, %arg3: memref<8x1xf32, #tpu.memory_space<vmem>>, %arg4: memref<8x1xf32, #tpu.memory_space<vmem>>, %arg5: memref<1x8x288xf32, #tpu.memory_space<vmem>>) attributes {dimension_semantics = [#tpu.dimension_semantics<parallel>], iteration_bounds = array<i64: 2>, scalar_prefetch = 0 : i64, scratch_operands = 0 : i64, tpu.core_type = #tpu.core_type<tc>, window_params = [{transform_indices = @transform_0, window_bounds = array<i64: 1, 4, 342>}, {pipeline_mode = #tpu.pipeline_mode<synchronous>, transform_indices = @transform_1, window_bounds = array<i64: 9, 8, 4>}, {pipeline_mode = #tpu.pipeline_mode<synchronous>, transform_indices = @transform_2, window_bounds = array<i64: 8, 1>}, {pipeline_mode = #tpu.pipeline_mode<synchronous>, transform_indices = @transform_3, window_bounds = array<i64: 8, 1>}, {transform_indices = @transform_4, window_bounds = array<i64: 1, 8, 288>}]} {
    %c0 = arith.constant 0 : index
    %c0_0 = arith.constant 0 : index
    %c0_1 = arith.constant 0 : index
    %0 = vector.load %arg1[%c0, %c0_0, %c0_1] : memref<1x4x342xbf16, #tpu.memory_space<vmem>>, vector<1x4x288xbf16>
    %1 = vector.shape_cast %0 : vector<1x4x288xbf16> to vector<4x288xbf16>
    %c0_2 = arith.constant 0 : index
    %c0_3 = arith.constant 0 : index
    %c0_4 = arith.constant 0 : index
    %2 = vector.load %arg2[%c0_2, %c0_3, %c0_4] : memref<9x8x4xbf16, #tpu.memory_space<vmem>>, vector<1x8x4xbf16>
    %3 = vector.shape_cast %2 : vector<1x8x4xbf16> to vector<8x4xbf16>
    %cst = arith.constant dense<0.000000e+00> : vector<8x288xf32>
    %4 = tpu.matmul %3, %1, %cst {dimension_numbers = #tpu.dot_dimension_numbers<[1], [0], [0], [1], [0, 0, 1, 1], [], []>} : vector<8x4xbf16>, vector<4x288xbf16>, vector<8x288xf32> -> vector<8x288xf32>
    %c0_5 = arith.constant 0 : index
    %c0_6 = arith.constant 0 : index
    %c1 = arith.constant 1 : index
    %5 = vector.load %arg1[%c0_5, %c0_6, %c1] : memref<1x4x342xbf16, #tpu.memory_space<vmem>>, vector<1x4x288xbf16>
    %6 = vector.shape_cast %5 : vector<1x4x288xbf16> to vector<4x288xbf16>
    %c1_7 = arith.constant 1 : index
    %c0_8 = arith.constant 0 : index
    %c0_9 = arith.constant 0 : index
    %7 = vector.load %arg2[%c1_7, %c0_8, %c0_9] : memref<9x8x4xbf16, #tpu.memory_space<vmem>>, vector<1x8x4xbf16>
    %8 = vector.shape_cast %7 : vector<1x8x4xbf16> to vector<8x4xbf16>
    %cst_10 = arith.constant dense<0.000000e+00> : vector<8x288xf32>
    %9 = tpu.matmul %8, %6, %cst_10 {dimension_numbers = #tpu.dot_dimension_numbers<[1], [0], [0], [1], [0, 0, 1, 1], [], []>} : vector<8x4xbf16>, vector<4x288xbf16>, vector<8x288xf32> -> vector<8x288xf32>
    %10 = arith.addf %4, %9 : vector<8x288xf32>
    %c0_11 = arith.constant 0 : index
    %c0_12 = arith.constant 0 : index
    %c2 = arith.constant 2 : index
    %11 = vector.load %arg1[%c0_11, %c0_12, %c2] : memref<1x4x342xbf16, #tpu.memory_space<vmem>>, vector<1x4x288xbf16>
    %12 = vector.shape_cast %11 : vector<1x4x288xbf16> to vector<4x288xbf16>
    %c2_13 = arith.constant 2 : index
    %c0_14 = arith.constant 0 : index
    %c0_15 = arith.constant 0 : index
    %13 = vector.load %arg2[%c2_13, %c0_14, %c0_15] : memref<9x8x4xbf16, #tpu.memory_space<vmem>>, vector<1x8x4xbf16>
    %14 = vector.shape_cast %13 : vector<1x8x4xbf16> to vector<8x4xbf16>
    %cst_16 = arith.constant dense<0.000000e+00> : vector<8x288xf32>
    %15 = tpu.matmul %14, %12, %cst_16 {dimension_numbers = #tpu.dot_dimension_numbers<[1], [0], [0], [1], [0, 0, 1, 1], [], []>} : vector<8x4xbf16>, vector<4x288xbf16>, vector<8x288xf32> -> vector<8x288xf32>
    %16 = arith.addf %10, %15 : vector<8x288xf32>
    %c0_17 = arith.constant 0 : index
    %c0_18 = arith.constant 0 : index
    %c18 = arith.constant 18 : index
    %17 = vector.load %arg1[%c0_17, %c0_18, %c18] : memref<1x4x342xbf16, #tpu.memory_space<vmem>>, vector<1x4x288xbf16>
    %18 = vector.shape_cast %17 : vector<1x4x288xbf16> to vector<4x288xbf16>
    %c3 = arith.constant 3 : index
    %c0_19 = arith.constant 0 : index
    %c0_20 = arith.constant 0 : index
    %19 = vector.load %arg2[%c3, %c0_19, %c0_20] : memref<9x8x4xbf16, #tpu.memory_space<vmem>>, vector<1x8x4xbf16>
    %20 = vector.shape_cast %19 : vector<1x8x4xbf16> to vector<8x4xbf16>
    %cst_21 = arith.constant dense<0.000000e+00> : vector<8x288xf32>
    %21 = tpu.matmul %20, %18, %cst_21 {dimension_numbers = #tpu.dot_dimension_numbers<[1], [0], [0], [1], [0, 0, 1, 1], [], []>} : vector<8x4xbf16>, vector<4x288xbf16>, vector<8x288xf32> -> vector<8x288xf32>
    %22 = arith.addf %16, %21 : vector<8x288xf32>
    %c0_22 = arith.constant 0 : index
    %c0_23 = arith.constant 0 : index
    %c19 = arith.constant 19 : index
    %23 = vector.load %arg1[%c0_22, %c0_23, %c19] : memref<1x4x342xbf16, #tpu.memory_space<vmem>>, vector<1x4x288xbf16>
    %24 = vector.shape_cast %23 : vector<1x4x288xbf16> to vector<4x288xbf16>
    %c4 = arith.constant 4 : index
    %c0_24 = arith.constant 0 : index
    %c0_25 = arith.constant 0 : index
    %25 = vector.load %arg2[%c4, %c0_24, %c0_25] : memref<9x8x4xbf16, #tpu.memory_space<vmem>>, vector<1x8x4xbf16>
    %26 = vector.shape_cast %25 : vector<1x8x4xbf16> to vector<8x4xbf16>
    %cst_26 = arith.constant dense<0.000000e+00> : vector<8x288xf32>
    %27 = tpu.matmul %26, %24, %cst_26 {dimension_numbers = #tpu.dot_dimension_numbers<[1], [0], [0], [1], [0, 0, 1, 1], [], []>} : vector<8x4xbf16>, vector<4x288xbf16>, vector<8x288xf32> -> vector<8x288xf32>
    %28 = arith.addf %22, %27 : vector<8x288xf32>
    %c0_27 = arith.constant 0 : index
    %c0_28 = arith.constant 0 : index
    %c20 = arith.constant 20 : index
    %29 = vector.load %arg1[%c0_27, %c0_28, %c20] : memref<1x4x342xbf16, #tpu.memory_space<vmem>>, vector<1x4x288xbf16>
    %30 = vector.shape_cast %29 : vector<1x4x288xbf16> to vector<4x288xbf16>
    %c5 = arith.constant 5 : index
    %c0_29 = arith.constant 0 : index
    %c0_30 = arith.constant 0 : index
    %31 = vector.load %arg2[%c5, %c0_29, %c0_30] : memref<9x8x4xbf16, #tpu.memory_space<vmem>>, vector<1x8x4xbf16>
    %32 = vector.shape_cast %31 : vector<1x8x4xbf16> to vector<8x4xbf16>
    %cst_31 = arith.constant dense<0.000000e+00> : vector<8x288xf32>
    %33 = tpu.matmul %32, %30, %cst_31 {dimension_numbers = #tpu.dot_dimension_numbers<[1], [0], [0], [1], [0, 0, 1, 1], [], []>} : vector<8x4xbf16>, vector<4x288xbf16>, vector<8x288xf32> -> vector<8x288xf32>
    %34 = arith.addf %28, %33 : vector<8x288xf32>
    %c0_32 = arith.constant 0 : index
    %c0_33 = arith.constant 0 : index
    %c36 = arith.constant 36 : index
    %35 = vector.load %arg1[%c0_32, %c0_33, %c36] : memref<1x4x342xbf16, #tpu.memory_space<vmem>>, vector<1x4x288xbf16>
    %36 = vector.shape_cast %35 : vector<1x4x288xbf16> to vector<4x288xbf16>
    %c6 = arith.constant 6 : index
    %c0_34 = arith.constant 0 : index
    %c0_35 = arith.constant 0 : index
    %37 = vector.load %arg2[%c6, %c0_34, %c0_35] : memref<9x8x4xbf16, #tpu.memory_space<vmem>>, vector<1x8x4xbf16>
    %38 = vector.shape_cast %37 : vector<1x8x4xbf16> to vector<8x4xbf16>
    %cst_36 = arith.constant dense<0.000000e+00> : vector<8x288xf32>
    %39 = tpu.matmul %38, %36, %cst_36 {dimension_numbers = #tpu.dot_dimension_numbers<[1], [0], [0], [1], [0, 0, 1, 1], [], []>} : vector<8x4xbf16>, vector<4x288xbf16>, vector<8x288xf32> -> vector<8x288xf32>
    %40 = arith.addf %34, %39 : vector<8x288xf32>
    %c0_37 = arith.constant 0 : index
    %c0_38 = arith.constant 0 : index
    %c37 = arith.constant 37 : index
    %41 = vector.load %arg1[%c0_37, %c0_38, %c37] : memref<1x4x342xbf16, #tpu.memory_space<vmem>>, vector<1x4x288xbf16>
    %42 = vector.shape_cast %41 : vector<1x4x288xbf16> to vector<4x288xbf16>
    %c7 = arith.constant 7 : index
    %c0_39 = arith.constant 0 : index
    %c0_40 = arith.constant 0 : index
    %43 = vector.load %arg2[%c7, %c0_39, %c0_40] : memref<9x8x4xbf16, #tpu.memory_space<vmem>>, vector<1x8x4xbf16>
    %44 = vector.shape_cast %43 : vector<1x8x4xbf16> to vector<8x4xbf16>
    %cst_41 = arith.constant dense<0.000000e+00> : vector<8x288xf32>
    %45 = tpu.matmul %44, %42, %cst_41 {dimension_numbers = #tpu.dot_dimension_numbers<[1], [0], [0], [1], [0, 0, 1, 1], [], []>} : vector<8x4xbf16>, vector<4x288xbf16>, vector<8x288xf32> -> vector<8x288xf32>
    %46 = arith.addf %40, %45 : vector<8x288xf32>
    %c0_42 = arith.constant 0 : index
    %c0_43 = arith.constant 0 : index
    %c38 = arith.constant 38 : index
    %47 = vector.load %arg1[%c0_42, %c0_43, %c38] : memref<1x4x342xbf16, #tpu.memory_space<vmem>>, vector<1x4x288xbf16>
    %48 = vector.shape_cast %47 : vector<1x4x288xbf16> to vector<4x288xbf16>
    %c8 = arith.constant 8 : index
    %c0_44 = arith.constant 0 : index
    %c0_45 = arith.constant 0 : index
    %49 = vector.load %arg2[%c8, %c0_44, %c0_45] : memref<9x8x4xbf16, #tpu.memory_space<vmem>>, vector<1x8x4xbf16>
    %50 = vector.shape_cast %49 : vector<1x8x4xbf16> to vector<8x4xbf16>
    %cst_46 = arith.constant dense<0.000000e+00> : vector<8x288xf32>
    %51 = tpu.matmul %50, %48, %cst_46 {dimension_numbers = #tpu.dot_dimension_numbers<[1], [0], [0], [1], [0, 0, 1, 1], [], []>} : vector<8x4xbf16>, vector<4x288xbf16>, vector<8x288xf32> -> vector<8x288xf32>
    %52 = arith.addf %46, %51 : vector<8x288xf32>
    %c0_47 = arith.constant 0 : index
    %c0_48 = arith.constant 0 : index
    %53 = vector.load %arg3[%c0_47, %c0_48] : memref<8x1xf32, #tpu.memory_space<vmem>>, vector<8x1xf32>
    %54 = vector.broadcast %53 : vector<8x1xf32> to vector<8x288xf32>
    %55 = arith.mulf %52, %54 : vector<8x288xf32>
    %c0_49 = arith.constant 0 : index
    %c0_50 = arith.constant 0 : index
    %56 = vector.load %arg4[%c0_49, %c0_50] : memref<8x1xf32, #tpu.memory_space<vmem>>, vector<8x1xf32>
    %57 = vector.broadcast %56 : vector<8x1xf32> to vector<8x288xf32>
    %58 = arith.addf %55, %57 : vector<8x288xf32>
    %cst_51 = arith.constant 0.000000e+00 : f32
    %59 = vector.broadcast %cst_51 : f32 to vector<8x288xf32>
    %60 = arith.maximumf %58, %59 : vector<8x288xf32>
    %c0_52 = arith.constant 0 : index
    %c0_53 = arith.constant 0 : index
    %c0_54 = arith.constant 0 : index
    %61 = vector.load %arg5[%c0_52, %c0_53, %c0_54] : memref<1x8x288xf32, #tpu.memory_space<vmem>>, vector<1x8x288xf32>
    %62 = vector.shape_cast %61 : vector<1x8x288xf32> to vector<8x288xf32>
    %63 = vector.shape_cast %60 : vector<8x288xf32> to vector<1x8x288xf32>
    tpu.vector_store %arg5[%c0_52, %c0_53, %c0_54], %63 {strides = array<i32>} : memref<1x8x288xf32, #tpu.memory_space<vmem>>, vector<1x8x288xf32>,
    return
  }
  func.func @transform_0(%arg0: i32) -> (i32, i32, i32) {
    %c0_i32 = arith.constant 0 : i32
    %c0_i32_0 = arith.constant 0 : i32
    %c0_i32_1 = arith.constant 0 : i32
    return %arg0, %c0_i32, %c0_i32_0 : i32, i32, i32
  }
  func.func @transform_1(%arg0: i32) -> (i32, i32, i32) {
    %c0_i32 = arith.constant 0 : i32
    %c0_i32_0 = arith.constant 0 : i32
    %c0_i32_1 = arith.constant 0 : i32
    %c0_i32_2 = arith.constant 0 : i32
    return %c0_i32, %c0_i32_0, %c0_i32_1 : i32, i32, i32
  }
  func.func @transform_2(%arg0: i32) -> (i32, i32) {
    %c0_i32 = arith.constant 0 : i32
    %c0_i32_0 = arith.constant 0 : i32
    %c0_i32_1 = arith.constant 0 : i32
    return %c0_i32, %c0_i32_0 : i32, i32
  }
  func.func @transform_3(%arg0: i32) -> (i32, i32) {
    %c0_i32 = arith.constant 0 : i32
    %c0_i32_0 = arith.constant 0 : i32
    %c0_i32_1 = arith.constant 0 : i32
    return %c0_i32, %c0_i32_0 : i32, i32
  }
  func.func @transform_4(%arg0: i32) -> (i32, i32, i32) {
    %c0_i32 = arith.constant 0 : i32
    %c0_i32_0 = arith.constant 0 : i32
    %c0_i32_1 = arith.constant 0 : i32
    return %arg0, %c0_i32, %c0_i32_0 : i32, i32, i32
  }
}

</mosaic_0001>

<llo_original>
// kernel: tpu_custom_call.1
$region0: #{tpu_custom_call.1}
  #allocation0 [shape = 'u32[]', space=smem, size = 0x4, offset = 0x4, fixed_abs, tag = 'smem constant byte address 0x4 - core index']
  #allocation1 [shape = 'u32[144,128]{1,0:T(1,128)}', space=vmem, size = 0x12000, scoped, tag = 'internal scratch']
  %s0 = inlined_call_operand.vmem [shape: bf16[2,4,342], index: 0, kind: input, shape index: {}]
  %s1 = inlined_call_operand.vmem [shape: bf16[9,8,4], index: 1, kind: input, shape index: {}]
  %s2 = inlined_call_operand.vmem [shape: f32[8,1], index: 2, kind: input, shape index: {}]
  %s3 = inlined_call_operand.vmem [shape: f32[8,1], index: 3, kind: input, shape index: {}]
  %s4 = inlined_call_operand.hbm [shape: f32[2,8,288], index: 4, kind: output, shape index: {}]
  %s5 = sld [smem:[#allocation0]]
  $region49: #{tpu_custom_call.1} parent=0
    _
  %s7 = ssub.s32 1, %s5
  %s8 = scalar_select 0, %s7, %s5
  $region1: #{tpu_custom_call.1} parent=0
    #allocation2 [shape = 'u8[24576]{0}', space=vmem, size = 0x6000, scoped, tag = 'output window, operand 0']
    #allocation3 [shape = 's32[2]{0}', space=sflag, size = 0x8, scoped, tag = 'scoped memory for tpu_custom_call.1']
    %9 = vsyncpa [#allocation3], 0
    %s10 = scalar_lea.sflag [#allocation3], 1
    %11 = vsyncpa %s10, 0
    loop: start=0, step=1, limit=4
    $region2: #{tpu_custom_call.1} parent=1 // loop_pre_header
      _
    $region3: #{tpu_custom_call.1} parent=1 // loop_header
      %s13 = sphi 0, %s17
      %p14 = scmp.ge.s32.totalorder %s13, 4
      %s23 = sphi 0, %s25
      %s26 = sphi 0, %s23
      %s27 = sphi 0, %s26
      %s43 = sphi 0, %s27
      %s47 = sphi 0, %s47
      %s49 = sphi 0, %s47
      %s50 = sphi 0, %s49
      %s64 = sphi 0, %s50
      %s68 = sphi 0, %s68
      %s70 = sphi 0, %s68
      %s71 = sphi 0, %s70
      %s85 = sphi 0, %s71
      %s89 = sphi 0, %s89
      %s91 = sphi 0, %s89
      %s92 = sphi 0, %s91
      %s106 = sphi 0, %s92
      %s112 = sphi 0, %s114
      %s115 = sphi 0, %s112
      %s116 = sphi 0, %s115
      %s132 = sphi 0, %s116
    $region4: #{tpu_custom_call.1} parent=1 // loop_header_branch
      %16 = sbr.rel (%p14) target = $region8
    $region5: #{tpu_custom_call.1} parent=1 // loop_body
      %s18 = ssub.s32 %s13, 1
      %s19 = ssub.s32 %s13, 2
      %s20 = sadd.s32 %s13, 1
      %s21 = ssub.s32 %s13, %s20
      %p22 = scmp.eq.s32.totalorder %s21, 0
      %s24 = sadd.s32 %s23, 1
      %s25 = scalar_select %p22, %s23, %s24
      %p28 = pneg %p22
      %p29 = scmp.eq.s32.totalorder %s13, 1
      %p30 = por %p28, %p29
      %p31 = scmp.ne.s32.totalorder %s23, %s26
      %p32 = scmp.eq.s32.totalorder %s13, 0
      %p33 = por %p31, %p32
      %p34 = scmp.ne.s32.totalorder %s23, %s26
      %p35 = scmp.eq.s32.totalorder %s18, 1
      %p36 = por %p34, %p35
      %p37 = scmp.ne.s32.totalorder %s26, %s27
      %p38 = scmp.eq.s32.totalorder %s18, 0
      %p39 = por %p37, %p38
      %p40 = scmp.ne.s32.totalorder %s26, %s27
      %p41 = scmp.eq.s32.totalorder %s19, 1
      %p42 = por %p40, %p41
      %p44 = scmp.ne.s32.totalorder %s27, %s43
      %p45 = scmp.eq.s32.totalorder %s19, 0
      %p46 = por %p44, %p45
      %s48 = sadd.s32 %s47, 1
      %p51 = scmp.eq.s32.totalorder %s13, 1
      %p52 = scmp.ne.s32.totalorder %s47, %s49
      %p53 = scmp.eq.s32.totalorder %s13, 0
      %p54 = por %p52, %p53
      %p55 = scmp.ne.s32.totalorder %s47, %s49
      %p56 = scmp.eq.s32.totalorder %s18, 1
      %p57 = por %p55, %p56
      %p58 = scmp.ne.s32.totalorder %s49, %s50
      %p59 = scmp.eq.s32.totalorder %s18, 0
      %p60 = por %p58, %p59
      %p61 = scmp.ne.s32.totalorder %s49, %s50
      %p62 = scmp.eq.s32.totalorder %s19, 1
      %p63 = por %p61, %p62
      %p65 = scmp.ne.s32.totalorder %s50, %s64
      %p66 = scmp.eq.s32.totalorder %s19, 0
      %p67 = por %p65, %p66
      %s69 = sadd.s32 %s68, 1
      %p72 = scmp.eq.s32.totalorder %s13, 1
      %p73 = scmp.ne.s32.totalorder %s68, %s70
      %p74 = scmp.eq.s32.totalorder %s13, 0
      %p75 = por %p73, %p74
      %p76 = scmp.ne.s32.totalorder %s68, %s70
      %p77 = scmp.eq.s32.totalorder %s18, 1
      %p78 = por %p76, %p77
      %p79 = scmp.ne.s32.totalorder %s70, %s71
      %p80 = scmp.eq.s32.totalorder %s18, 0
      %p81 = por %p79, %p80
      %p82 = scmp.ne.s32.totalorder %s70, %s71
      %p83 = scmp.eq.s32.totalorder %s19, 1
      %p84 = por %p82, %p83
      %p86 = scmp.ne.s32.totalorder %s71, %s85
      %p87 = scmp.eq.s32.totalorder %s19, 0
      %p88 = por %p86, %p87
      %s90 = sadd.s32 %s89, 1
      %p93 = scmp.eq.s32.totalorder %s13, 1
      %p94 = scmp.ne.s32.totalorder %s89, %s91
      %p95 = scmp.eq.s32.totalorder %s13, 0
      %p96 = por %p94, %p95
      %p97 = scmp.ne.s32.totalorder %s89, %s91
      %p98 = scmp.eq.s32.totalorder %s18, 1
      %p99 = por %p97, %p98
      %p100 = scmp.ne.s32.totalorder %s91, %s92
      %p101 = scmp.eq.s32.totalorder %s18, 0
      %p102 = por %p100, %p101
      %p103 = scmp.ne.s32.totalorder %s91, %s92
      %p104 = scmp.eq.s32.totalorder %s19, 1
      %p105 = por %p103, %p104
      %p107 = scmp.ne.s32.totalorder %s92, %s106
      %p108 = scmp.eq.s32.totalorder %s19, 0
      %p109 = por %p107, %p108
      %s110 = ssub.s32 %s13, %s20
      %p111 = scmp.eq.s32.totalorder %s110, 0
      %s113 = sadd.s32 %s112, 1
      %s114 = scalar_select %p111, %s112, %s113
      %p117 = pneg %p111
      %p118 = scmp.eq.s32.totalorder %s13, 1
      %p119 = por %p117, %p118
      %p120 = scmp.ne.s32.totalorder %s112, %s115
      %p121 = scmp.eq.s32.totalorder %s13, 0
      %p122 = por %p120, %p121
      %p123 = scmp.ne.s32.totalorder %s112, %s115
      %p124 = scmp.eq.s32.totalorder %s18, 1
      %p125 = por %p123, %p124
      %p126 = scmp.ne.s32.totalorder %s115, %s116
      %p127 = scmp.eq.s32.totalorder %s18, 0
      %p128 = por %p126, %p127
      %p129 = scmp.ne.s32.totalorder %s115, %s116
      %p130 = scmp.eq.s32.totalorder %s19, 1
      %p131 = por %p129, %p130
      %p133 = scmp.ne.s32.totalorder %s116, %s132
      %p134 = scmp.eq.s32.totalorder %s19, 0
      %p135 = por %p133, %p134
      %p136 = scmp.le.s32.totalorder 1, %s13
      %p137 = scmp.lt.s32.totalorder %s13, 3
      %p138 = pnand %p136, %p137
      %p139 = pneg %p138
      // Predicated region
      $region9: #{tpu_custom_call.1} parent=5 // pred_check
        _
      $region10: #{tpu_custom_call.1} parent=5 // pred_check_branch
        %141 = sbr.rel (%p138) target = $region12
      $region11: #{tpu_custom_call.1} parent=5 // pred_region
        %s142 = ssub.s32 %s13, 1
        // Predicated region
        $region13: #{tpu_custom_call.1} parent=11 // pred_check
          %p143 = pneg %p60
        $region14: #{tpu_custom_call.1} parent=11 // pred_check_branch
          %145 = sbr.rel (%p143) target = $region16
        $region15: #{tpu_custom_call.1} parent=11 // pred_region
          _
        $region16: #{tpu_custom_call.1} parent=11 // pred_fallthru
          _
        // Predicated region
        $region17: #{tpu_custom_call.1} parent=11 // pred_check
          %p146 = pneg %p81
        $region18: #{tpu_custom_call.1} parent=11 // pred_check_branch
          %148 = sbr.rel (%p146) target = $region20
        $region19: #{tpu_custom_call.1} parent=11 // pred_region
          _
        $region20: #{tpu_custom_call.1} parent=11 // pred_fallthru
          _
        // Predicated region
        $region21: #{tpu_custom_call.1} parent=11 // pred_check
          %p149 = pneg %p102
        $region22: #{tpu_custom_call.1} parent=11 // pred_check_branch
          %151 = sbr.rel (%p149) target = $region24
        $region23: #{tpu_custom_call.1} parent=11 // pred_region
          _
        $region24: #{tpu_custom_call.1} parent=11 // pred_fallthru
          _
      $region12: #{tpu_custom_call.1} parent=5 // pred_fallthru
        _
      %p152 = scmp.lt.s32.totalorder %s13, 2
      // Predicated region
      $region25: #{tpu_custom_call.1} parent=5 // pred_check
        %p153 = pneg %p152
      $region26: #{tpu_custom_call.1} parent=5 // pred_check_branch
        %155 = sbr.rel (%p153) target = $region28
      $region27: #{tpu_custom_call.1} parent=5 // pred_region
        // Predicated region
        $region29: #{tpu_custom_call.1} parent=27 // pred_check
          %p156 = pneg %p33
        $region30: #{tpu_custom_call.1} parent=27 // pred_check_branch
          %158 = sbr.rel (%p156) target = $region32
        $region31: #{tpu_custom_call.1} parent=27 // pred_region
          %p159 = scmp.lt.s32.totalorder %s13, 1
          %s160 = scalar_select %p159, %s13, 1
          %s161 = smul.addr %s160, 3
          %s162 = smul.addr %s161, 2
          %s163 = scalar_lea.vmem %s0, %s162
        $region32: #{tpu_custom_call.1} parent=27 // pred_fallthru
          _
      $region28: #{tpu_custom_call.1} parent=5 // pred_fallthru
        _
      %p164 = scmp.le.s32.totalorder 1, %s13
      %p165 = scmp.lt.s32.totalorder %s13, 3
      %p166 = pnand %p164, %p165
      %p167 = pneg %p166
      // Predicated region
      $region33: #{tpu_custom_call.1} parent=5 // pred_check
        _
      $region34: #{tpu_custom_call.1} parent=5 // pred_check_branch
        %169 = sbr.rel (%p166) target = $region36
      $region35: #{tpu_custom_call.1} parent=5 // pred_region
        %s170 = ssub.s32 %s13, 1
        %p171 = scmp.lt.s32.totalorder %s18, 1
        %s172 = scalar_select %p171, %s18, 1
        %s173 = smul.addr %s172, 3
        %s174 = smul.addr %s173, 2
        %s175 = scalar_lea.vmem %s0, %s174
        %p176 = pneg %p39
        %p177 = pneg %p36
        %p178 = pneg %p60
        %p179 = pneg %p57
        %p180 = pneg %p81
        %p181 = pneg %p78
        %p182 = pneg %p102
        %p183 = pneg %p99
        %p184 = pneg %p128
        %p185 = pneg %p125
        %s186 = sand.u32 %s115, 1
        %s187 = scalar_lea.sflag [#allocation3], %s186
        %s188 = sand.u32 %s115, 1
        %s189 = smul.addr %s188, 24
        %s190 = scalar_lea.vmem [#allocation2], %s189
        %p191 = scmp.lt.s32.totalorder %s18, 1
        %s192 = scalar_select %p191, %s18, 1
        %s193 = smul.addr %s192, 3
        %s194 = smul.addr %s193, 2
        %s195 = scalar_lea.vmem %s0, %s194
        %v197 = vld [vmem:[%s195] sm:$0x3f]
        %v198 = vld [vmem:[%s1] sm:$0xf]
        %s199 = scalar_lea.vmem %s1, 4
        %v200 = vld [vmem:[%s199] sm:$0xf]
        %v202 = vcombine.high %v197, %v197
        %v204 = vunpack.c.l.s4 1983009808
        %v205 = vunpack.c.0.s8 %v204
        %v206 = vlaneseq
        %v207 = vshrl.u32 %v206, 7
        %v208 = vsub.s32 %v205, %v207
        %v209 = vrot.slane %v197, %v208
        %v211 = vunpack.c.l.s4 1983009808
        %v212 = vunpack.c.0.s8 %v211
        %v213 = vlaneseq
        %v214 = vshrl.u32 %v213, 7
        %v215 = vsub.s32 %v212, %v214
        %v216 = vrot.slane %v202, %v215
        %v217 = vcombine.high %v209, %v209
        %218 = vrot.lane.b32.xlu0 %v209, 127
        %v219 = vpop.permute.xlu0 %218
        %220 = vrot.lane.b32.xlu0 %v217, 127
        %v221 = vpop.permute.xlu0 %220
        %222 = vrot.lane.b32.xlu0 %v216, 127
        %v223 = vpop.permute.xlu0 %222
        %vm224 = vcmask 1039360
        %v225 = vsel %vm224, %v219, %v221
        %v226 = vsel %vm224, %v221, %v223
        %vm227 = vcmask 31744
        %v229 = vsel %vm227, %v200, 0
        %vm231 = vcmask 1041408
        %v233 = vsel %vm231, %v225, 0
        %v236 = vsel %vm231, %v226, 0
        %v239 = vsel %vm231, %v223, 0
        %241 = vmatprep.subr.bf16.mxu0 %v236
        %242 = vmatpush1.bf16.msra.mxu0 %v233
        %243 = vmatprep.subr.bf16.mxu0 0
        %244 = vmatpush1.bf16.msra.mxu0 0
        %245 = vmatprep.subr.bf16.mxu0 0
        %246 = vmatpush1.bf16.msra.mxu0 0
        %247 = vmatprep.subr.bf16.mxu0 0
        %248 = vmatpush1.bf16.msra.mxu0 0
        %249 = vmatprep.subr.bf16.mxu0 0
        %250 = vmatpush1.bf16.msra.mxu0 0
        %251 = vmatprep.subr.bf16.mxu0 0
        %252 = vmatpush1.bf16.msra.mxu0 0
        %253 = vmatprep.subr.bf16.mxu0 0
        %254 = vmatpush1.bf16.msra.mxu0 0
        %255 = vmatprep.subr.bf16.mxu0 0
        %256 = vmatpush1.bf16.msra.mxu0 0
        %257 = vmatprep.subr.bf16.mxu0 0
        %258 = vmatpush1.bf16.msra.mxu0 0
        %259 = vmatprep.subr.bf16.mxu0 0
        %260 = vmatpush1.bf16.msra.mxu0 0
        %261 = vmatprep.subr.bf16.mxu0 0
        %262 = vmatpush1.bf16.msra.mxu0 0
        %263 = vmatprep.subr.bf16.mxu0 0
        %264 = vmatpush1.bf16.msra.mxu0 0
        %265 = vmatprep.subr.bf16.mxu0 0
        %266 = vmatpush1.bf16.msra.mxu0 0
        %267 = vmatprep.subr.bf16.mxu0 0
        %268 = vmatpush1.bf16.msra.mxu0 0
        %269 = vmatprep.subr.bf16.mxu0 0
        %270 = vmatpush1.bf16.msra.mxu0 0
        %271 = vmatprep.subr.bf16.mxu0 0
        %272 = vmatpush1.bf16.msra.mxu0 0
        %273 = vmatprep.mubr.bf16.mxu0 0
        %274 = vmatmul.mubr.bf16.gmra.mrb[0].mxu0 %v229
        %v275 = vpop.f32.mrb[0].mxu0
        %v276 = vadd.f32 0.0, %v275
        %v277 = vpop.f32.mrb[0].mxu0
        %v278 = vadd.f32 0.0, %v277
        %v279 = vpop.f32.mrb[0].mxu0
        %v280 = vpop.f32.mrb[0].mxu0
        %281 = vdwg.mxu0
        %282 = vmatprep.subr.bf16.mxu0 0
        %283 = vmatpush1.bf16.msra.mxu0 %v239
        %284 = vmatprep.subr.bf16.mxu0 0
        %285 = vmatpush1.bf16.msra.mxu0 0
        %286 = vmatprep.subr.bf16.mxu0 0
        %287 = vmatpush1.bf16.msra.mxu0 0
        %288 = vmatprep.subr.bf16.mxu0 0
        %289 = vmatpush1.bf16.msra.mxu0 0
        %290 = vmatprep.subr.bf16.mxu0 0
        %291 = vmatpush1.bf16.msra.mxu0 0
        %292 = vmatprep.subr.bf16.mxu0 0
        %293 = vmatpush1.bf16.msra.mxu0 0
        %294 = vmatprep.subr.bf16.mxu0 0
        %295 = vmatpush1.bf16.msra.mxu0 0
        %296 = vmatprep.subr.bf16.mxu0 0
        %297 = vmatpush1.bf16.msra.mxu0 0
        %298 = vmatprep.subr.bf16.mxu0 0
        %299 = vmatpush1.bf16.msra.mxu0 0
        %300 = vmatprep.subr.bf16.mxu0 0
        %301 = vmatpush1.bf16.msra.mxu0 0
        %302 = vmatprep.subr.bf16.mxu0 0
        %303 = vmatpush1.bf16.msra.mxu0 0
        %304 = vmatprep.subr.bf16.mxu0 0
        %305 = vmatpush1.bf16.msra.mxu0 0
        %306 = vmatprep.subr.bf16.mxu0 0
        %307 = vmatpush1.bf16.msra.mxu0 0
        %308 = vmatprep.subr.bf16.mxu0 0
        %309 = vmatpush1.bf16.msra.mxu0 0
        %310 = vmatprep.subr.bf16.mxu0 0
        %311 = vmatpush1.bf16.msra.mxu0 0
        %312 = vmatprep.subr.bf16.mxu0 0
        %313 = vmatpush1.bf16.msra.mxu0 0
        %314 = vmatprep.mubr.bf16.mxu0 0
        %315 = vmatmul.mubr.bf16.gmra.mrb[0].mxu0 %v229
        %v316 = vpop.f32.mrb[0].mxu0
        %v317 = vadd.f32 0.0, %v316
        %v318 = vpop.f32.mrb[0].mxu0
        %v319 = vpop.f32.mrb[0].mxu0
        %v320 = vpop.f32.mrb[0].mxu0
        %321 = vdwg.mxu0
        %v323 = vsel %vm227, %v198, 0
        %v326 = vsel %vm231, %v209, 0
        %v329 = vsel %vm231, %v217, 0
        %v332 = vsel %vm231, %v216, 0
        %334 = vmatprep.subr.bf16.mxu0 %v329
        %335 = vmatpush1.bf16.msra.mxu0 %v326
        %336 = vmatprep.subr.bf16.mxu0 0
        %337 = vmatpush1.bf16.msra.mxu0 0
        %338 = vmatprep.subr.bf16.mxu0 0
        %339 = vmatpush1.bf16.msra.mxu0 0
        %340 = vmatprep.subr.bf16.mxu0 0
        %341 = vmatpush1.bf16.msra.mxu0 0
        %342 = vmatprep.subr.bf16.mxu0 0
        %343 = vmatpush1.bf16.msra.mxu0 0
        %344 = vmatprep.subr.bf16.mxu0 0
        %345 = vmatpush1.bf16.msra.mxu0 0
        %346 = vmatprep.subr.bf16.mxu0 0
        %347 = vmatpush1.bf16.msra.mxu0 0
        %348 = vmatprep.subr.bf16.mxu0 0
        %349 = vmatpush1.bf16.msra.mxu0 0
        %350 = vmatprep.subr.bf16.mxu0 0
        %351 = vmatpush1.bf16.msra.mxu0 0
        %352 = vmatprep.subr.bf16.mxu0 0
        %353 = vmatpush1.bf16.msra.mxu0 0
        %354 = vmatprep.subr.bf16.mxu0 0
        %355 = vmatpush1.bf16.msra.mxu0 0
        %356 = vmatprep.subr.bf16.mxu0 0
        %357 = vmatpush1.bf16.msra.mxu0 0
        %358 = vmatprep.subr.bf16.mxu0 0
        %359 = vmatpush1.bf16.msra.mxu0 0
        %360 = vmatprep.subr.bf16.mxu0 0
        %361 = vmatpush1.bf16.msra.mxu0 0
        %362 = vmatprep.subr.bf16.mxu0 0
        %363 = vmatpush1.bf16.msra.mxu0 0
        %364 = vmatprep.subr.bf16.mxu0 0
        %365 = vmatpush1.bf16.msra.mxu0 0
        %366 = vmatprep.mubr.bf16.mxu0 0
        %367 = vmatmul.mubr.bf16.gmra.mrb[0].mxu0 %v323
        %v368 = vpop.f32.mrb[0].mxu0
        %v369 = vadd.f32 %v276, %v368
        %v370 = vpop.f32.mrb[0].mxu0
        %v371 = vadd.f32 %v278, %v370
        %v372 = vpop.f32.mrb[0].mxu0
        %v373 = vpop.f32.mrb[0].mxu0
        %374 = vdwg.mxu0
        %375 = vmatprep.subr.bf16.mxu0 0
        %376 = vmatpush1.bf16.msra.mxu0 %v332
        %377 = vmatprep.subr.bf16.mxu0 0
        %378 = vmatpush1.bf16.msra.mxu0 0
        %379 = vmatprep.subr.bf16.mxu0 0
        %380 = vmatpush1.bf16.msra.mxu0 0
        %381 = vmatprep.subr.bf16.mxu0 0
        %382 = vmatpush1.bf16.msra.mxu0 0
        %383 = vmatprep.subr.bf16.mxu0 0
        %384 = vmatpush1.bf16.msra.mxu0 0
        %385 = vmatprep.subr.bf16.mxu0 0
        %386 = vmatpush1.bf16.msra.mxu0 0
        %387 = vmatprep.subr.bf16.mxu0 0
        %388 = vmatpush1.bf16.msra.mxu0 0
        %389 = vmatprep.subr.bf16.mxu0 0
        %390 = vmatpush1.bf16.msra.mxu0 0
        %391 = vmatprep.subr.bf16.mxu0 0
        %392 = vmatpush1.bf16.msra.mxu0 0
        %393 = vmatprep.subr.bf16.mxu0 0
        %394 = vmatpush1.bf16.msra.mxu0 0
        %395 = vmatprep.subr.bf16.mxu0 0
        %396 = vmatpush1.bf16.msra.mxu0 0
        %397 = vmatprep.subr.bf16.mxu0 0
        %398 = vmatpush1.bf16.msra.mxu0 0
        %399 = vmatprep.subr.bf16.mxu0 0
        %400 = vmatpush1.bf16.msra.mxu0 0
        %401 = vmatprep.subr.bf16.mxu0 0
        %402 = vmatpush1.bf16.msra.mxu0 0
        %403 = vmatprep.subr.bf16.mxu0 0
        %404 = vmatpush1.bf16.msra.mxu0 0
        %405 = vmatprep.subr.bf16.mxu0 0
        %406 = vmatpush1.bf16.msra.mxu0 0
        %407 = vmatprep.mubr.bf16.mxu0 0
        %408 = vmatmul.mubr.bf16.gmra.mrb[0].mxu0 %v323
        %v409 = vpop.f32.mrb[0].mxu0
        %v410 = vadd.f32 %v317, %v409
        %v411 = vpop.f32.mrb[0].mxu0
        %v412 = vpop.f32.mrb[0].mxu0
        %v413 = vpop.f32.mrb[0].mxu0
        %414 = vdwg.mxu0
        %v415 = vld [vmem:[%s195] sm:$0x3f]
        %s416 = scalar_lea.vmem %s1, 8
        %v417 = vld [vmem:[%s416] sm:$0xf]
        %v419 = vcombine.high %v415, %v415
        %v421 = vunpack.c.l.s4 1983009808
        %v422 = vunpack.c.0.s8 %v421
        %v423 = vlaneseq
        %v424 = vshrl.u32 %v423, 7
        %v425 = vsub.s32 %v422, %v424
        %v426 = vrot.slane %v415, %v425
        %v428 = vunpack.c.l.s4 1983009808
        %v429 = vunpack.c.0.s8 %v428
        %v430 = vlaneseq
        %v431 = vshrl.u32 %v430, 7
        %v432 = vsub.s32 %v429, %v431
        %v433 = vrot.slane %v419, %v432
        %v434 = vcombine.high %v426, %v426
        %435 = vrot.lane.b32.xlu0 %v426, 126
        %v436 = vpop.permute.xlu0 %435
        %437 = vrot.lane.b32.xlu0 %v434, 126
        %v438 = vpop.permute.xlu0 %437
        %439 = vrot.lane.b32.xlu0 %v433, 126
        %v440 = vpop.permute.xlu0 %439
        %vm441 = vcmask 1031168
        %v442 = vsel %vm441, %v436, %v438
        %v443 = vsel %vm441, %v438, %v440
        %v445 = vsel %vm227, %v417, 0
        %v448 = vsel %vm231, %v442, 0
        %v451 = vsel %vm231, %v443, 0
        %v454 = vsel %vm231, %v440, 0
        %456 = vmatprep.subr.bf16.mxu0 %v451
        %457 = vmatpush1.bf16.msra.mxu0 %v448
        %458 = vmatprep.subr.bf16.mxu0 0
        %459 = vmatpush1.bf16.msra.mxu0 0
        %460 = vmatprep.subr.bf16.mxu0 0
        %461 = vmatpush1.bf16.msra.mxu0 0
        %462 = vmatprep.subr.bf16.mxu0 0
        %463 = vmatpush1.bf16.msra.mxu0 0
        %464 = vmatprep.subr.bf16.mxu0 0
        %465 = vmatpush1.bf16.msra.mxu0 0
        %466 = vmatprep.subr.bf16.mxu0 0
        %467 = vmatpush1.bf16.msra.mxu0 0
        %468 = vmatprep.subr.bf16.mxu0 0
        %469 = vmatpush1.bf16.msra.mxu0 0
        %470 = vmatprep.subr.bf16.mxu0 0
        %471 = vmatpush1.bf16.msra.mxu0 0
        %472 = vmatprep.subr.bf16.mxu0 0
        %473 = vmatpush1.bf16.msra.mxu0 0
        %474 = vmatprep.subr.bf16.mxu0 0
        %475 = vmatpush1.bf16.msra.mxu0 0
        %476 = vmatprep.subr.bf16.mxu0 0
        %477 = vmatpush1.bf16.msra.mxu0 0
        %478 = vmatprep.subr.bf16.mxu0 0
        %479 = vmatpush1.bf16.msra.mxu0 0
        %480 = vmatprep.subr.bf16.mxu0 0
        %481 = vmatpush1.bf16.msra.mxu0 0
        %482 = vmatprep.subr.bf16.mxu0 0
        %483 = vmatpush1.bf16.msra.mxu0 0
        %484 = vmatprep.subr.bf16.mxu0 0
        %485 = vmatpush1.bf16.msra.mxu0 0
        %486 = vmatprep.subr.bf16.mxu0 0
        %487 = vmatpush1.bf16.msra.mxu0 0
        %488 = vmatprep.mubr.bf16.mxu0 0
        %489 = vmatmul.mubr.bf16.gmra.mrb[0].mxu0 %v445
        %v490 = vpop.f32.mrb[0].mxu0
        %v491 = vadd.f32 0.0, %v490
        %v492 = vpop.f32.mrb[0].mxu0
        %v493 = vadd.f32 0.0, %v492
        %v494 = vpop.f32.mrb[0].mxu0
        %v495 = vpop.f32.mrb[0].mxu0
        %496 = vdwg.mxu0
        %497 = vmatprep.subr.bf16.mxu0 0
        %498 = vmatpush1.bf16.msra.mxu0 %v454
        %499 = vmatprep.subr.bf16.mxu0 0
        %500 = vmatpush1.bf16.msra.mxu0 0
        %501 = vmatprep.subr.bf16.mxu0 0
        %502 = vmatpush1.bf16.msra.mxu0 0
        %503 = vmatprep.subr.bf16.mxu0 0
        %504 = vmatpush1.bf16.msra.mxu0 0
        %505 = vmatprep.subr.bf16.mxu0 0
        %506 = vmatpush1.bf16.msra.mxu0 0
        %507 = vmatprep.subr.bf16.mxu0 0
        %508 = vmatpush1.bf16.msra.mxu0 0
        %509 = vmatprep.subr.bf16.mxu0 0
        %510 = vmatpush1.bf16.msra.mxu0 0
        %511 = vmatprep.subr.bf16.mxu0 0
        %512 = vmatpush1.bf16.msra.mxu0 0
        %513 = vmatprep.subr.bf16.mxu0 0
        %514 = vmatpush1.bf16.msra.mxu0 0
        %515 = vmatprep.subr.bf16.mxu0 0
        %516 = vmatpush1.bf16.msra.mxu0 0
        %517 = vmatprep.subr.bf16.mxu0 0
        %518 = vmatpush1.bf16.msra.mxu0 0
        %519 = vmatprep.subr.bf16.mxu0 0
        %520 = vmatpush1.bf16.msra.mxu0 0
        %521 = vmatprep.subr.bf16.mxu0 0
        %522 = vmatpush1.bf16.msra.mxu0 0
        %523 = vmatprep.subr.bf16.mxu0 0
        %524 = vmatpush1.bf16.msra.mxu0 0
        %525 = vmatprep.subr.bf16.mxu0 0
        %526 = vmatpush1.bf16.msra.mxu0 0
        %527 = vmatprep.subr.bf16.mxu0 0
        %528 = vmatpush1.bf16.msra.mxu0 0
        %529 = vmatprep.mubr.bf16.mxu0 0
        %530 = vmatmul.mubr.bf16.gmra.mrb[0].mxu0 %v445
        %v531 = vpop.f32.mrb[0].mxu0
        %v532 = vadd.f32 0.0, %v531
        %v533 = vpop.f32.mrb[0].mxu0
        %v534 = vpop.f32.mrb[0].mxu0
        %v535 = vpop.f32.mrb[0].mxu0
        %536 = vdwg.mxu0
        %v537 = vadd.f32 %v369, %v491
        %v538 = vadd.f32 %v371, %v493
        %v539 = vadd.f32 %v410, %v532
        %v540 = vld [vmem:[%s195] sm:$0x3f]
        %s541 = scalar_lea.vmem %s1, 12
        %v542 = vld [vmem:[%s541] sm:$0xf]
        %v544 = vcombine.high %v540, %v540
        %v546 = vunpack.c.l.s4 1983009808
        %v547 = vunpack.c.0.s8 %v546
        %v548 = vlaneseq
        %v549 = vshrl.u32 %v548, 7
        %v550 = vsub.s32 %v547, %v549
        %v551 = vrot.slane %v540, %v550
        %v553 = vunpack.c.l.s4 1983009808
        %v554 = vunpack.c.0.s8 %v553
        %v555 = vlaneseq
        %v556 = vshrl.u32 %v555, 7
        %v557 = vsub.s32 %v554, %v556
        %v558 = vrot.slane %v544, %v557
        %v559 = vcombine.high %v551, %v551
        %560 = vrot.lane.b32.xlu0 %v551, 110
        %v561 = vpop.permute.xlu0 %560
        %562 = vrot.lane.b32.xlu0 %v559, 110
        %v563 = vpop.permute.xlu0 %562
        %564 = vrot.lane.b32.xlu0 %v558, 110
        %v565 = vpop.permute.xlu0 %564
        %vm566 = vcmask 900096
        %v567 = vsel %vm566, %v561, %v563
        %v568 = vsel %vm566, %v563, %v565
        %v570 = vsel %vm227, %v542, 0
        %v573 = vsel %vm231, %v567, 0
        %v576 = vsel %vm231, %v568, 0
        %v579 = vsel %vm231, %v565, 0
        %581 = vmatprep.subr.bf16.mxu0 %v576
        %582 = vmatpush1.bf16.msra.mxu0 %v573
        %583 = vmatprep.subr.bf16.mxu0 0
        %584 = vmatpush1.bf16.msra.mxu0 0
        %585 = vmatprep.subr.bf16.mxu0 0
        %586 = vmatpush1.bf16.msra.mxu0 0
        %587 = vmatprep.subr.bf16.mxu0 0
        %588 = vmatpush1.bf16.msra.mxu0 0
        %589 = vmatprep.subr.bf16.mxu0 0
        %590 = vmatpush1.bf16.msra.mxu0 0
        %591 = vmatprep.subr.bf16.mxu0 0
        %592 = vmatpush1.bf16.msra.mxu0 0
        %593 = vmatprep.subr.bf16.mxu0 0
        %594 = vmatpush1.bf16.msra.mxu0 0
        %595 = vmatprep.subr.bf16.mxu0 0
        %596 = vmatpush1.bf16.msra.mxu0 0
        %597 = vmatprep.subr.bf16.mxu0 0
        %598 = vmatpush1.bf16.msra.mxu0 0
        %599 = vmatprep.subr.bf16.mxu0 0
        %600 = vmatpush1.bf16.msra.mxu0 0
        %601 = vmatprep.subr.bf16.mxu0 0
        %602 = vmatpush1.bf16.msra.mxu0 0
        %603 = vmatprep.subr.bf16.mxu0 0
        %604 = vmatpush1.bf16.msra.mxu0 0
        %605 = vmatprep.subr.bf16.mxu0 0
        %606 = vmatpush1.bf16.msra.mxu0 0
        %607 = vmatprep.subr.bf16.mxu0 0
        %608 = vmatpush1.bf16.msra.mxu0 0
        %609 = vmatprep.subr.bf16.mxu0 0
        %610 = vmatpush1.bf16.msra.mxu0 0
        %611 = vmatprep.subr.bf16.mxu0 0
        %612 = vmatpush1.bf16.msra.mxu0 0
        %613 = vmatprep.mubr.bf16.mxu0 0
        %614 = vmatmul.mubr.bf16.gmra.mrb[0].mxu0 %v570
        %v615 = vpop.f32.mrb[0].mxu0
        %v616 = vadd.f32 0.0, %v615
        %v617 = vpop.f32.mrb[0].mxu0
        %v618 = vadd.f32 0.0, %v617
        %v619 = vpop.f32.mrb[0].mxu0
        %v620 = vpop.f32.mrb[0].mxu0
        %621 = vdwg.mxu0
        %622 = vmatprep.subr.bf16.mxu0 0
        %623 = vmatpush1.bf16.msra.mxu0 %v579
        %624 = vmatprep.subr.bf16.mxu0 0
        %625 = vmatpush1.bf16.msra.mxu0 0
        %626 = vmatprep.subr.bf16.mxu0 0
        %627 = vmatpush1.bf16.msra.mxu0 0
        %628 = vmatprep.subr.bf16.mxu0 0
        %629 = vmatpush1.bf16.msra.mxu0 0
        %630 = vmatprep.subr.bf16.mxu0 0
        %631 = vmatpush1.bf16.msra.mxu0 0
        %632 = vmatprep.subr.bf16.mxu0 0
        %633 = vmatpush1.bf16.msra.mxu0 0
        %634 = vmatprep.subr.bf16.mxu0 0
        %635 = vmatpush1.bf16.msra.mxu0 0
        %636 = vmatprep.subr.bf16.mxu0 0
        %637 = vmatpush1.bf16.msra.mxu0 0
        %638 = vmatprep.subr.bf16.mxu0 0
        %639 = vmatpush1.bf16.msra.mxu0 0
        %640 = vmatprep.subr.bf16.mxu0 0
        %641 = vmatpush1.bf16.msra.mxu0 0
        %642 = vmatprep.subr.bf16.mxu0 0
        %643 = vmatpush1.bf16.msra.mxu0 0
        %644 = vmatprep.subr.bf16.mxu0 0
        %645 = vmatpush1.bf16.msra.mxu0 0
        %646 = vmatprep.subr.bf16.mxu0 0
        %647 = vmatpush1.bf16.msra.mxu0 0
        %648 = vmatprep.subr.bf16.mxu0 0
        %649 = vmatpush1.bf16.msra.mxu0 0
        %650 = vmatprep.subr.bf16.mxu0 0
        %651 = vmatpush1.bf16.msra.mxu0 0
        %652 = vmatprep.subr.bf16.mxu0 0
        %653 = vmatpush1.bf16.msra.mxu0 0
        %654 = vmatprep.mubr.bf16.mxu0 0
        %655 = vmatmul.mubr.bf16.gmra.mrb[0].mxu0 %v570
        %v656 = vpop.f32.mrb[0].mxu0
        %v657 = vadd.f32 0.0, %v656
        %v658 = vpop.f32.mrb[0].mxu0
        %v659 = vpop.f32.mrb[0].mxu0
        %v660 = vpop.f32.mrb[0].mxu0
        %661 = vdwg.mxu0
        %v662 = vadd.f32 %v537, %v616
        %v663 = vadd.f32 %v538, %v618
        %v664 = vadd.f32 %v539, %v657
        %v665 = vld [vmem:[%s195] sm:$0x3f]
        %s666 = scalar_lea.vmem %s1, 16
        %v667 = vld [vmem:[%s666] sm:$0xf]
        %v669 = vcombine.high %v665, %v665
        %v671 = vunpack.c.l.s4 1983009808
        %v672 = vunpack.c.0.s8 %v671
        %v673 = vlaneseq
        %v674 = vshrl.u32 %v673, 7
        %v675 = vsub.s32 %v672, %v674
        %v676 = vrot.slane %v665, %v675
        %v678 = vunpack.c.l.s4 1983009808
        %v679 = vunpack.c.0.s8 %v678
        %v680 = vlaneseq
        %v681 = vshrl.u32 %v680, 7
        %v682 = vsub.s32 %v679, %v681
        %v683 = vrot.slane %v669, %v682
        %v684 = vcombine.high %v676, %v676
        %685 = vrot.lane.b32.xlu0 %v676, 109
        %v686 = vpop.permute.xlu0 %685
        %687 = vrot.lane.b32.xlu0 %v684, 109
        %v688 = vpop.permute.xlu0 %687
        %689 = vrot.lane.b32.xlu0 %v683, 109
        %v690 = vpop.permute.xlu0 %689
        %vm691 = vcmask 891904
        %v692 = vsel %vm691, %v686, %v688
        %v693 = vsel %vm691, %v688, %v690
        %v695 = vsel %vm227, %v667, 0
        %v698 = vsel %vm231, %v692, 0
        %v701 = vsel %vm231, %v693, 0
        %v704 = vsel %vm231, %v690, 0
        %706 = vmatprep.subr.bf16.mxu0 %v701
        %707 = vmatpush1.bf16.msra.mxu0 %v698
        %708 = vmatprep.subr.bf16.mxu0 0
        %709 = vmatpush1.bf16.msra.mxu0 0
        %710 = vmatprep.subr.bf16.mxu0 0
        %711 = vmatpush1.bf16.msra.mxu0 0
        %712 = vmatprep.subr.bf16.mxu0 0
        %713 = vmatpush1.bf16.msra.mxu0 0
        %714 = vmatprep.subr.bf16.mxu0 0
        %715 = vmatpush1.bf16.msra.mxu0 0
        %716 = vmatprep.subr.bf16.mxu0 0
        %717 = vmatpush1.bf16.msra.mxu0 0
        %718 = vmatprep.subr.bf16.mxu0 0
        %719 = vmatpush1.bf16.msra.mxu0 0
        %720 = vmatprep.subr.bf16.mxu0 0
        %721 = vmatpush1.bf16.msra.mxu0 0
        %722 = vmatprep.subr.bf16.mxu0 0
        %723 = vmatpush1.bf16.msra.mxu0 0
        %724 = vmatprep.subr.bf16.mxu0 0
        %725 = vmatpush1.bf16.msra.mxu0 0
        %726 = vmatprep.subr.bf16.mxu0 0
        %727 = vmatpush1.bf16.msra.mxu0 0
        %728 = vmatprep.subr.bf16.mxu0 0
        %729 = vmatpush1.bf16.msra.mxu0 0
        %730 = vmatprep.subr.bf16.mxu0 0
        %731 = vmatpush1.bf16.msra.mxu0 0
        %732 = vmatprep.subr.bf16.mxu0 0
        %733 = vmatpush1.bf16.msra.mxu0 0
        %734 = vmatprep.subr.bf16.mxu0 0
        %735 = vmatpush1.bf16.msra.mxu0 0
        %736 = vmatprep.subr.bf16.mxu0 0
        %737 = vmatpush1.bf16.msra.mxu0 0
        %738 = vmatprep.mubr.bf16.mxu0 0
        %739 = vmatmul.mubr.bf16.gmra.mrb[0].mxu0 %v695
        %v740 = vpop.f32.mrb[0].mxu0
        %v741 = vadd.f32 0.0, %v740
        %v742 = vpop.f32.mrb[0].mxu0
        %v743 = vadd.f32 0.0, %v742
        %v744 = vpop.f32.mrb[0].mxu0
        %v745 = vpop.f32.mrb[0].mxu0
        %746 = vdwg.mxu0
        %747 = vmatprep.subr.bf16.mxu0 0
        %748 = vmatpush1.bf16.msra.mxu0 %v704
        %749 = vmatprep.subr.bf16.mxu0 0
        %750 = vmatpush1.bf16.msra.mxu0 0
        %751 = vmatprep.subr.bf16.mxu0 0
        %752 = vmatpush1.bf16.msra.mxu0 0
        %753 = vmatprep.subr.bf16.mxu0 0
        %754 = vmatpush1.bf16.msra.mxu0 0
        %755 = vmatprep.subr.bf16.mxu0 0
        %756 = vmatpush1.bf16.msra.mxu0 0
        %757 = vmatprep.subr.bf16.mxu0 0
        %758 = vmatpush1.bf16.msra.mxu0 0
        %759 = vmatprep.subr.bf16.mxu0 0
        %760 = vmatpush1.bf16.msra.mxu0 0
        %761 = vmatprep.subr.bf16.mxu0 0
        %762 = vmatpush1.bf16.msra.mxu0 0
        %763 = vmatprep.subr.bf16.mxu0 0
        %764 = vmatpush1.bf16.msra.mxu0 0
        %765 = vmatprep.subr.bf16.mxu0 0
        %766 = vmatpush1.bf16.msra.mxu0 0
        %767 = vmatprep.subr.bf16.mxu0 0
        %768 = vmatpush1.bf16.msra.mxu0 0
        %769 = vmatprep.subr.bf16.mxu0 0
        %770 = vmatpush1.bf16.msra.mxu0 0
        %771 = vmatprep.subr.bf16.mxu0 0
        %772 = vmatpush1.bf16.msra.mxu0 0
        %773 = vmatprep.subr.bf16.mxu0 0
        %774 = vmatpush1.bf16.msra.mxu0 0
        %775 = vmatprep.subr.bf16.mxu0 0
        %776 = vmatpush1.bf16.msra.mxu0 0
        %777 = vmatprep.subr.bf16.mxu0 0
        %778 = vmatpush1.bf16.msra.mxu0 0
        %779 = vmatprep.mubr.bf16.mxu0 0
        %780 = vmatmul.mubr.bf16.gmra.mrb[0].mxu0 %v695
        %v781 = vpop.f32.mrb[0].mxu0
        %v782 = vadd.f32 0.0, %v781
        %v783 = vpop.f32.mrb[0].mxu0
        %v784 = vpop.f32.mrb[0].mxu0
        %v785 = vpop.f32.mrb[0].mxu0
        %786 = vdwg.mxu0
        %v787 = vadd.f32 %v662, %v741
        %v788 = vadd.f32 %v663, %v743
        %v789 = vadd.f32 %v664, %v782
        %v790 = vld [vmem:[%s195] sm:$0x3f]
        %s791 = scalar_lea.vmem %s1, 20
        %v792 = vld [vmem:[%s791] sm:$0xf]
        %v794 = vcombine.high %v790, %v790
        %v796 = vunpack.c.l.s4 1983009808
        %v797 = vunpack.c.0.s8 %v796
        %v798 = vlaneseq
        %v799 = vshrl.u32 %v798, 7
        %v800 = vsub.s32 %v797, %v799
        %v801 = vrot.slane %v790, %v800
        %v803 = vunpack.c.l.s4 1983009808
        %v804 = vunpack.c.0.s8 %v803
        %v805 = vlaneseq
        %v806 = vshrl.u32 %v805, 7
        %v807 = vsub.s32 %v804, %v806
        %v808 = vrot.slane %v794, %v807
        %v809 = vcombine.high %v801, %v801
        %810 = vrot.lane.b32.xlu0 %v801, 108
        %v811 = vpop.permute.xlu0 %810
        %812 = vrot.lane.b32.xlu0 %v809, 108
        %v813 = vpop.permute.xlu0 %812
        %814 = vrot.lane.b32.xlu0 %v808, 108
        %v815 = vpop.permute.xlu0 %814
        %vm816 = vcmask 883712
        %v817 = vsel %vm816, %v811, %v813
        %v818 = vsel %vm816, %v813, %v815
        %v820 = vsel %vm227, %v792, 0
        %v823 = vsel %vm231, %v817, 0
        %v826 = vsel %vm231, %v818, 0
        %v829 = vsel %vm231, %v815, 0
        %831 = vmatprep.subr.bf16.mxu0 %v826
        %832 = vmatpush1.bf16.msra.mxu0 %v823
        %833 = vmatprep.subr.bf16.mxu0 0
        %834 = vmatpush1.bf16.msra.mxu0 0
        %835 = vmatprep.subr.bf16.mxu0 0
        %836 = vmatpush1.bf16.msra.mxu0 0
        %837 = vmatprep.subr.bf16.mxu0 0
        %838 = vmatpush1.bf16.msra.mxu0 0
        %839 = vmatprep.subr.bf16.mxu0 0
        %840 = vmatpush1.bf16.msra.mxu0 0
        %841 = vmatprep.subr.bf16.mxu0 0
        %842 = vmatpush1.bf16.msra.mxu0 0
        %843 = vmatprep.subr.bf16.mxu0 0
        %844 = vmatpush1.bf16.msra.mxu0 0
        %845 = vmatprep.subr.bf16.mxu0 0
        %846 = vmatpush1.bf16.msra.mxu0 0
        %847 = vmatprep.subr.bf16.mxu0 0
        %848 = vmatpush1.bf16.msra.mxu0 0
        %849 = vmatprep.subr.bf16.mxu0 0
        %850 = vmatpush1.bf16.msra.mxu0 0
        %851 = vmatprep.subr.bf16.mxu0 0
        %852 = vmatpush1.bf16.msra.mxu0 0
        %853 = vmatprep.subr.bf16.mxu0 0
        %854 = vmatpush1.bf16.msra.mxu0 0
        %855 = vmatprep.subr.bf16.mxu0 0
        %856 = vmatpush1.bf16.msra.mxu0 0
        %857 = vmatprep.subr.bf16.mxu0 0
        %858 = vmatpush1.bf16.msra.mxu0 0
        %859 = vmatprep.subr.bf16.mxu0 0
        %860 = vmatpush1.bf16.msra.mxu0 0
        %861 = vmatprep.subr.bf16.mxu0 0
        %862 = vmatpush1.bf16.msra.mxu0 0
        %863 = vmatprep.mubr.bf16.mxu0 0
        %864 = vmatmul.mubr.bf16.gmra.mrb[0].mxu0 %v820
        %v865 = vpop.f32.mrb[0].mxu0
        %v866 = vadd.f32 0.0, %v865
        %v867 = vpop.f32.mrb[0].mxu0
        %v868 = vadd.f32 0.0, %v867
        %v869 = vpop.f32.mrb[0].mxu0
        %v870 = vpop.f32.mrb[0].mxu0
        %871 = vdwg.mxu0
        %872 = vmatprep.subr.bf16.mxu0 0
        %873 = vmatpush1.bf16.msra.mxu0 %v829
        %874 = vmatprep.subr.bf16.mxu0 0
        %875 = vmatpush1.bf16.msra.mxu0 0
        %876 = vmatprep.subr.bf16.mxu0 0
        %877 = vmatpush1.bf16.msra.mxu0 0
        %878 = vmatprep.subr.bf16.mxu0 0
        %879 = vmatpush1.bf16.msra.mxu0 0
        %880 = vmatprep.subr.bf16.mxu0 0
        %881 = vmatpush1.bf16.msra.mxu0 0
        %882 = vmatprep.subr.bf16.mxu0 0
        %883 = vmatpush1.bf16.msra.mxu0 0
        %884 = vmatprep.subr.bf16.mxu0 0
        %885 = vmatpush1.bf16.msra.mxu0 0
        %886 = vmatprep.subr.bf16.mxu0 0
        %887 = vmatpush1.bf16.msra.mxu0 0
        %888 = vmatprep.subr.bf16.mxu0 0
        %889 = vmatpush1.bf16.msra.mxu0 0
        %890 = vmatprep.subr.bf16.mxu0 0
        %891 = vmatpush1.bf16.msra.mxu0 0
        %892 = vmatprep.subr.bf16.mxu0 0
        %893 = vmatpush1.bf16.msra.mxu0 0
        %894 = vmatprep.subr.bf16.mxu0 0
        %895 = vmatpush1.bf16.msra.mxu0 0
        %896 = vmatprep.subr.bf16.mxu0 0
        %897 = vmatpush1.bf16.msra.mxu0 0
        %898 = vmatprep.subr.bf16.mxu0 0
        %899 = vmatpush1.bf16.msra.mxu0 0
        %900 = vmatprep.subr.bf16.mxu0 0
        %901 = vmatpush1.bf16.msra.mxu0 0
        %902 = vmatprep.subr.bf16.mxu0 0
        %903 = vmatpush1.bf16.msra.mxu0 0
        %904 = vmatprep.mubr.bf16.mxu0 0
        %905 = vmatmul.mubr.bf16.gmra.mrb[0].mxu0 %v820
        %v906 = vpop.f32.mrb[0].mxu0
        %v907 = vadd.f32 0.0, %v906
        %v908 = vpop.f32.mrb[0].mxu0
        %v909 = vpop.f32.mrb[0].mxu0
        %v910 = vpop.f32.mrb[0].mxu0
        %911 = vdwg.mxu0
        %v912 = vadd.f32 %v787, %v866
        %v913 = vadd.f32 %v788, %v868
        %v914 = vadd.f32 %v789, %v907
        %v915 = vld [vmem:[%s195] sm:$0x3f]
        %s916 = scalar_lea.vmem %s1, 24
        %v917 = vld [vmem:[%s916] sm:$0xf]
        %v919 = vcombine.high %v915, %v915
        %v921 = vunpack.c.l.s4 1983009808
        %v922 = vunpack.c.0.s8 %v921
        %v923 = vlaneseq
        %v924 = vshrl.u32 %v923, 7
        %v925 = vsub.s32 %v922, %v924
        %v926 = vrot.slane %v915, %v925
        %v928 = vunpack.c.l.s4 1983009808
        %v929 = vunpack.c.0.s8 %v928
        %v930 = vlaneseq
        %v931 = vshrl.u32 %v930, 7
        %v932 = vsub.s32 %v929, %v931
        %v933 = vrot.slane %v919, %v932
        %v934 = vcombine.high %v926, %v926
        %935 = vrot.lane.b32.xlu0 %v926, 92
        %v936 = vpop.permute.xlu0 %935
        %937 = vrot.lane.b32.xlu0 %v934, 92
        %v938 = vpop.permute.xlu0 %937
        %939 = vrot.lane.b32.xlu0 %v933, 92
        %v940 = vpop.permute.xlu0 %939
        %vm941 = vcmask 752640
        %v942 = vsel %vm941, %v936, %v938
        %v943 = vsel %vm941, %v938, %v940
        %v945 = vsel %vm227, %v917, 0
        %v948 = vsel %vm231, %v942, 0
        %v951 = vsel %vm231, %v943, 0
        %v954 = vsel %vm231, %v940, 0
        %956 = vmatprep.subr.bf16.mxu0 %v951
        %957 = vmatpush1.bf16.msra.mxu0 %v948
        %958 = vmatprep.subr.bf16.mxu0 0
        %959 = vmatpush1.bf16.msra.mxu0 0
        %960 = vmatprep.subr.bf16.mxu0 0
        %961 = vmatpush1.bf16.msra.mxu0 0
        %962 = vmatprep.subr.bf16.mxu0 0
        %963 = vmatpush1.bf16.msra.mxu0 0
        %964 = vmatprep.subr.bf16.mxu0 0
        %965 = vmatpush1.bf16.msra.mxu0 0
        %966 = vmatprep.subr.bf16.mxu0 0
        %967 = vmatpush1.bf16.msra.mxu0 0
        %968 = vmatprep.subr.bf16.mxu0 0
        %969 = vmatpush1.bf16.msra.mxu0 0
        %970 = vmatprep.subr.bf16.mxu0 0
        %971 = vmatpush1.bf16.msra.mxu0 0
        %972 = vmatprep.subr.bf16.mxu0 0
        %973 = vmatpush1.bf16.msra.mxu0 0
        %974 = vmatprep.subr.bf16.mxu0 0
        %975 = vmatpush1.bf16.msra.mxu0 0
        %976 = vmatprep.subr.bf16.mxu0 0
        %977 = vmatpush1.bf16.msra.mxu0 0
        %978 = vmatprep.subr.bf16.mxu0 0
        %979 = vmatpush1.bf16.msra.mxu0 0
        %980 = vmatprep.subr.bf16.mxu0 0
        %981 = vmatpush1.bf16.msra.mxu0 0
        %982 = vmatprep.subr.bf16.mxu0 0
        %983 = vmatpush1.bf16.msra.mxu0 0
        %984 = vmatprep.subr.bf16.mxu0 0
        %985 = vmatpush1.bf16.msra.mxu0 0
        %986 = vmatprep.subr.bf16.mxu0 0
        %987 = vmatpush1.bf16.msra.mxu0 0
        %988 = vmatprep.mubr.bf16.mxu0 0
        %989 = vmatmul.mubr.bf16.gmra.mrb[0].mxu0 %v945
        %v990 = vpop.f32.mrb[0].mxu0
        %v991 = vadd.f32 0.0, %v990
        %v992 = vpop.f32.mrb[0].mxu0
        %v993 = vadd.f32 0.0, %v992
        %v994 = vpop.f32.mrb[0].mxu0
        %v995 = vpop.f32.mrb[0].mxu0
        %996 = vdwg.mxu0
        %997 = vmatprep.subr.bf16.mxu0 0
        %998 = vmatpush1.bf16.msra.mxu0 %v954
        %999 = vmatprep.subr.bf16.mxu0 0
        %1000 = vmatpush1.bf16.msra.mxu0 0
        %1001 = vmatprep.subr.bf16.mxu0 0
        %1002 = vmatpush1.bf16.msra.mxu0 0
        %1003 = vmatprep.subr.bf16.mxu0 0
        %1004 = vmatpush1.bf16.msra.mxu0 0
        %1005 = vmatprep.subr.bf16.mxu0 0
        %1006 = vmatpush1.bf16.msra.mxu0 0
        %1007 = vmatprep.subr.bf16.mxu0 0
        %1008 = vmatpush1.bf16.msra.mxu0 0
        %1009 = vmatprep.subr.bf16.mxu0 0
        %1010 = vmatpush1.bf16.msra.mxu0 0
        %1011 = vmatprep.subr.bf16.mxu0 0
        %1012 = vmatpush1.bf16.msra.mxu0 0
        %1013 = vmatprep.subr.bf16.mxu0 0
        %1014 = vmatpush1.bf16.msra.mxu0 0
        %1015 = vmatprep.subr.bf16.mxu0 0
        %1016 = vmatpush1.bf16.msra.mxu0 0
        %1017 = vmatprep.subr.bf16.mxu0 0
        %1018 = vmatpush1.bf16.msra.mxu0 0
        %1019 = vmatprep.subr.bf16.mxu0 0
        %1020 = vmatpush1.bf16.msra.mxu0 0
        %1021 = vmatprep.subr.bf16.mxu0 0
        %1022 = vmatpush1.bf16.msra.mxu0 0
        %1023 = vmatprep.subr.bf16.mxu0 0
        %1024 = vmatpush1.bf16.msra.mxu0 0
        %1025 = vmatprep.subr.bf16.mxu0 0
        %1026 = vmatpush1.bf16.msra.mxu0 0
        %1027 = vmatprep.subr.bf16.mxu0 0
        %1028 = vmatpush1.bf16.msra.mxu0 0
        %1029 = vmatprep.mubr.bf16.mxu0 0
        %1030 = vmatmul.mubr.bf16.gmra.mrb[0].mxu0 %v945
        %v1031 = vpop.f32.mrb[0].mxu0
        %v1032 = vadd.f32 0.0, %v1031
        %v1033 = vpop.f32.mrb[0].mxu0
        %v1034 = vpop.f32.mrb[0].mxu0
        %v1035 = vpop.f32.mrb[0].mxu0
        %1036 = vdwg.mxu0
        %v1037 = vadd.f32 %v912, %v991
        %v1038 = vadd.f32 %v913, %v993
        %v1039 = vadd.f32 %v914, %v1032
        %v1040 = vld [vmem:[%s195] sm:$0x3f]
        %s1041 = scalar_lea.vmem %s1, 28
        %v1042 = vld [vmem:[%s1041] sm:$0xf]
        %v1044 = vcombine.high %v1040, %v1040
        %v1046 = vunpack.c.l.s4 1983009808
        %v1047 = vunpack.c.0.s8 %v1046
        %v1048 = vlaneseq
        %v1049 = vshrl.u32 %v1048, 7
        %v1050 = vsub.s32 %v1047, %v1049
        %v1051 = vrot.slane %v1040, %v1050
        %v1053 = vunpack.c.l.s4 1983009808
        %v1054 = vunpack.c.0.s8 %v1053
        %v1055 = vlaneseq
        %v1056 = vshrl.u32 %v1055, 7
        %v1057 = vsub.s32 %v1054, %v1056
        %v1058 = vrot.slane %v1044, %v1057
        %v1059 = vcombine.high %v1051, %v1051
        %1060 = vrot.lane.b32.xlu0 %v1051, 91
        %v1061 = vpop.permute.xlu0 %1060
        %1062 = vrot.lane.b32.xlu0 %v1059, 91
        %v1063 = vpop.permute.xlu0 %1062
        %1064 = vrot.lane.b32.xlu0 %v1058, 91
        %v1065 = vpop.permute.xlu0 %1064
        %vm1066 = vcmask 744448
        %v1067 = vsel %vm1066, %v1061, %v1063
        %v1068 = vsel %vm1066, %v1063, %v1065
        %v1070 = vsel %vm227, %v1042, 0
        %v1073 = vsel %vm231, %v1067, 0
        %v1076 = vsel %vm231, %v1068, 0
        %v1079 = vsel %vm231, %v1065, 0
        %1081 = vmatprep.subr.bf16.mxu0 %v1076
        %1082 = vmatpush1.bf16.msra.mxu0 %v1073
        %1083 = vmatprep.subr.bf16.mxu0 0
        %1084 = vmatpush1.bf16.msra.mxu0 0
        %1085 = vmatprep.subr.bf16.mxu0 0
        %1086 = vmatpush1.bf16.msra.mxu0 0
        %1087 = vmatprep.subr.bf16.mxu0 0
        %1088 = vmatpush1.bf16.msra.mxu0 0
        %1089 = vmatprep.subr.bf16.mxu0 0
        %1090 = vmatpush1.bf16.msra.mxu0 0
        %1091 = vmatprep.subr.bf16.mxu0 0
        %1092 = vmatpush1.bf16.msra.mxu0 0
        %1093 = vmatprep.subr.bf16.mxu0 0
        %1094 = vmatpush1.bf16.msra.mxu0 0
        %1095 = vmatprep.subr.bf16.mxu0 0
        %1096 = vmatpush1.bf16.msra.mxu0 0
        %1097 = vmatprep.subr.bf16.mxu0 0
        %1098 = vmatpush1.bf16.msra.mxu0 0
        %1099 = vmatprep.subr.bf16.mxu0 0
        %1100 = vmatpush1.bf16.msra.mxu0 0
        %1101 = vmatprep.subr.bf16.mxu0 0
        %1102 = vmatpush1.bf16.msra.mxu0 0
        %1103 = vmatprep.subr.bf16.mxu0 0
        %1104 = vmatpush1.bf16.msra.mxu0 0
        %1105 = vmatprep.subr.bf16.mxu0 0
        %1106 = vmatpush1.bf16.msra.mxu0 0
        %1107 = vmatprep.subr.bf16.mxu0 0
        %1108 = vmatpush1.bf16.msra.mxu0 0
        %1109 = vmatprep.subr.bf16.mxu0 0
        %1110 = vmatpush1.bf16.msra.mxu0 0
        %1111 = vmatprep.subr.bf16.mxu0 0
        %1112 = vmatpush1.bf16.msra.mxu0 0
        %1113 = vmatprep.mubr.bf16.mxu0 0
        %1114 = vmatmul.mubr.bf16.gmra.mrb[0].mxu0 %v1070
        %v1115 = vpop.f32.mrb[0].mxu0
        %v1116 = vadd.f32 0.0, %v1115
        %v1117 = vpop.f32.mrb[0].mxu0
        %v1118 = vadd.f32 0.0, %v1117
        %v1119 = vpop.f32.mrb[0].mxu0
        %v1120 = vpop.f32.mrb[0].mxu0
        %1121 = vdwg.mxu0
        %1122 = vmatprep.subr.bf16.mxu0 0
        %1123 = vmatpush1.bf16.msra.mxu0 %v1079
        %1124 = vmatprep.subr.bf16.mxu0 0
        %1125 = vmatpush1.bf16.msra.mxu0 0
        %1126 = vmatprep.subr.bf16.mxu0 0
        %1127 = vmatpush1.bf16.msra.mxu0 0
        %1128 = vmatprep.subr.bf16.mxu0 0
        %1129 = vmatpush1.bf16.msra.mxu0 0
        %1130 = vmatprep.subr.bf16.mxu0 0
        %1131 = vmatpush1.bf16.msra.mxu0 0
        %1132 = vmatprep.subr.bf16.mxu0 0
        %1133 = vmatpush1.bf16.msra.mxu0 0
        %1134 = vmatprep.subr.bf16.mxu0 0
        %1135 = vmatpush1.bf16.msra.mxu0 0
        %1136 = vmatprep.subr.bf16.mxu0 0
        %1137 = vmatpush1.bf16.msra.mxu0 0
        %1138 = vmatprep.subr.bf16.mxu0 0
        %1139 = vmatpush1.bf16.msra.mxu0 0
        %1140 = vmatprep.subr.bf16.mxu0 0
        %1141 = vmatpush1.bf16.msra.mxu0 0
        %1142 = vmatprep.subr.bf16.mxu0 0
        %1143 = vmatpush1.bf16.msra.mxu0 0
        %1144 = vmatprep.subr.bf16.mxu0 0
        %1145 = vmatpush1.bf16.msra.mxu0 0
        %1146 = vmatprep.subr.bf16.mxu0 0
        %1147 = vmatpush1.bf16.msra.mxu0 0
        %1148 = vmatprep.subr.bf16.mxu0 0
        %1149 = vmatpush1.bf16.msra.mxu0 0
        %1150 = vmatprep.subr.bf16.mxu0 0
        %1151 = vmatpush1.bf16.msra.mxu0 0
        %1152 = vmatprep.subr.bf16.mxu0 0
        %1153 = vmatpush1.bf16.msra.mxu0 0
        %1154 = vmatprep.mubr.bf16.mxu0 0
        %1155 = vmatmul.mubr.bf16.gmra.mrb[0].mxu0 %v1070
        %v1156 = vpop.f32.mrb[0].mxu0
        %v1157 = vadd.f32 0.0, %v1156
        %v1158 = vpop.f32.mrb[0].mxu0
        %v1159 = vpop.f32.mrb[0].mxu0
        %v1160 = vpop.f32.mrb[0].mxu0
        %1161 = vdwg.mxu0
        %v1162 = vadd.f32 %v1037, %v1116
        %v1163 = vadd.f32 %v1038, %v1118
        %v1164 = vadd.f32 %v1039, %v1157
        %v1165 = vld [vmem:[%s195] sm:$0x3f]
        %s1166 = scalar_lea.vmem %s1, 32
        %v1167 = vld [vmem:[%s1166] sm:$0xf]
        %v1169 = vcombine.high %v1165, %v1165
        %v1171 = vunpack.c.l.s4 1983009808
        %v1172 = vunpack.c.0.s8 %v1171
        %v1173 = vlaneseq
        %v1174 = vshrl.u32 %v1173, 7
        %v1175 = vsub.s32 %v1172, %v1174
        %v1176 = vrot.slane %v1165, %v1175
        %v1178 = vunpack.c.l.s4 1983009808
        %v1179 = vunpack.c.0.s8 %v1178
        %v1180 = vlaneseq
        %v1181 = vshrl.u32 %v1180, 7
        %v1182 = vsub.s32 %v1179, %v1181
        %v1183 = vrot.slane %v1169, %v1182
        %v1184 = vcombine.high %v1176, %v1176
        %1185 = vrot.lane.b32.xlu0 %v1176, 90
        %v1186 = vpop.permute.xlu0 %1185
        %1187 = vrot.lane.b32.xlu0 %v1184, 90
        %v1188 = vpop.permute.xlu0 %1187
        %1189 = vrot.lane.b32.xlu0 %v1183, 90
        %v1190 = vpop.permute.xlu0 %1189
        %vm1191 = vcmask 736256
        %v1192 = vsel %vm1191, %v1186, %v1188
        %v1193 = vsel %vm1191, %v1188, %v1190
        %v1195 = vsel %vm227, %v1167, 0
        %v1198 = vsel %vm231, %v1192, 0
        %v1201 = vsel %vm231, %v1193, 0
        %v1204 = vsel %vm231, %v1190, 0
        %1206 = vmatprep.subr.bf16.mxu0 %v1201
        %1207 = vmatpush1.bf16.msra.mxu0 %v1198
        %1208 = vmatprep.subr.bf16.mxu0 0
        %1209 = vmatpush1.bf16.msra.mxu0 0
        %1210 = vmatprep.subr.bf16.mxu0 0
        %1211 = vmatpush1.bf16.msra.mxu0 0
        %1212 = vmatprep.subr.bf16.mxu0 0
        %1213 = vmatpush1.bf16.msra.mxu0 0
        %1214 = vmatprep.subr.bf16.mxu0 0
        %1215 = vmatpush1.bf16.msra.mxu0 0
        %1216 = vmatprep.subr.bf16.mxu0 0
        %1217 = vmatpush1.bf16.msra.mxu0 0
        %1218 = vmatprep.subr.bf16.mxu0 0
        %1219 = vmatpush1.bf16.msra.mxu0 0
        %1220 = vmatprep.subr.bf16.mxu0 0
        %1221 = vmatpush1.bf16.msra.mxu0 0
        %1222 = vmatprep.subr.bf16.mxu0 0
        %1223 = vmatpush1.bf16.msra.mxu0 0
        %1224 = vmatprep.subr.bf16.mxu0 0
        %1225 = vmatpush1.bf16.msra.mxu0 0
        %1226 = vmatprep.subr.bf16.mxu0 0
        %1227 = vmatpush1.bf16.msra.mxu0 0
        %1228 = vmatprep.subr.bf16.mxu0 0
        %1229 = vmatpush1.bf16.msra.mxu0 0
        %1230 = vmatprep.subr.bf16.mxu0 0
        %1231 = vmatpush1.bf16.msra.mxu0 0
        %1232 = vmatprep.subr.bf16.mxu0 0
        %1233 = vmatpush1.bf16.msra.mxu0 0
        %1234 = vmatprep.subr.bf16.mxu0 0
        %1235 = vmatpush1.bf16.msra.mxu0 0
        %1236 = vmatprep.subr.bf16.mxu0 0
        %1237 = vmatpush1.bf16.msra.mxu0 0
        %1238 = vmatprep.mubr.bf16.mxu0 0
        %1239 = vmatmul.mubr.bf16.gmra.mrb[0].mxu0 %v1195
        %v1240 = vpop.f32.mrb[0].mxu0
        %v1241 = vadd.f32 0.0, %v1240
        %v1242 = vpop.f32.mrb[0].mxu0
        %v1243 = vadd.f32 0.0, %v1242
        %v1244 = vpop.f32.mrb[0].mxu0
        %v1245 = vpop.f32.mrb[0].mxu0
        %1246 = vdwg.mxu0
        %1247 = vmatprep.subr.bf16.mxu0 0
        %1248 = vmatpush1.bf16.msra.mxu0 %v1204
        %1249 = vmatprep.subr.bf16.mxu0 0
        %1250 = vmatpush1.bf16.msra.mxu0 0
        %1251 = vmatprep.subr.bf16.mxu0 0
        %1252 = vmatpush1.bf16.msra.mxu0 0
        %1253 = vmatprep.subr.bf16.mxu0 0
        %1254 = vmatpush1.bf16.msra.mxu0 0
        %1255 = vmatprep.subr.bf16.mxu0 0
        %1256 = vmatpush1.bf16.msra.mxu0 0
        %1257 = vmatprep.subr.bf16.mxu0 0
        %1258 = vmatpush1.bf16.msra.mxu0 0
        %1259 = vmatprep.subr.bf16.mxu0 0
        %1260 = vmatpush1.bf16.msra.mxu0 0
        %1261 = vmatprep.subr.bf16.mxu0 0
        %1262 = vmatpush1.bf16.msra.mxu0 0
        %1263 = vmatprep.subr.bf16.mxu0 0
        %1264 = vmatpush1.bf16.msra.mxu0 0
        %1265 = vmatprep.subr.bf16.mxu0 0
        %1266 = vmatpush1.bf16.msra.mxu0 0
        %1267 = vmatprep.subr.bf16.mxu0 0
        %1268 = vmatpush1.bf16.msra.mxu0 0
        %1269 = vmatprep.subr.bf16.mxu0 0
        %1270 = vmatpush1.bf16.msra.mxu0 0
        %1271 = vmatprep.subr.bf16.mxu0 0
        %1272 = vmatpush1.bf16.msra.mxu0 0
        %1273 = vmatprep.subr.bf16.mxu0 0
        %1274 = vmatpush1.bf16.msra.mxu0 0
        %1275 = vmatprep.subr.bf16.mxu0 0
        %1276 = vmatpush1.bf16.msra.mxu0 0
        %1277 = vmatprep.subr.bf16.mxu0 0
        %1278 = vmatpush1.bf16.msra.mxu0 0
        %1279 = vmatprep.mubr.bf16.mxu0 0
        %1280 = vmatmul.mubr.bf16.gmra.mrb[0].mxu0 %v1195
        %v1281 = vpop.f32.mrb[0].mxu0
        %v1282 = vadd.f32 0.0, %v1281
        %v1283 = vpop.f32.mrb[0].mxu0
        %v1284 = vpop.f32.mrb[0].mxu0
        %v1285 = vpop.f32.mrb[0].mxu0
        %1286 = vdwg.mxu0
        %v1287 = vadd.f32 %v1162, %v1241
        %v1288 = vadd.f32 %v1163, %v1243
        %v1289 = vadd.f32 %v1164, %v1282
        %v1290 = vld [vmem:[%s2] sm:$0xff]
        %1292 = vset.pattern.permute.xlu0 0
        %1293 = vperm.xlu0 %1292, %v1290
        %v1294 = vpop.permute.xlu0 %1293
        %v1296 = vmul.f32 %v1287, %v1294
        %v1297 = vmul.f32 %v1288, %v1294
        %v1298 = vmul.f32 %v1289, %v1294
        %v1299 = vld [vmem:[%s3] sm:$0xff]
        %1301 = vset.pattern.permute.xlu0 0
        %1302 = vperm.xlu0 %1301, %v1299
        %v1303 = vpop.permute.xlu0 %1302
        %v1305 = vadd.f32 %v1296, %v1303
        %v1306 = vadd.f32 %v1297, %v1303
        %v1307 = vadd.f32 %v1298, %v1303
        %v1308 = vmax.f32 %v1305, 0.0
        %v1309 = vmax.f32 %v1306, 0.0
        %v1310 = vmax.f32 %v1307, 0.0
        %1311 = vst [vmem:[%s190] sm:$0xff] %v1308
        %1312 = vst [vmem:[%s190 + $0x8] sm:$0xff] %v1309
        %vm1313 = vcmask 261120
        %1314 = vst.msk [vmem:[%s190 + $0x10] sm:$0xff] %vm1313, %v1310
        %s1315 = sand.u32 %s115, 1
        %s1316 = scalar_lea.sflag [#allocation3], %s1315
        %s1317 = sand.u32 %s115, 1
        %s1318 = smul.addr %s1317, 24
        %s1319 = scalar_lea.vmem [#allocation2], %s1318
        // Predicated region
        $region37: #{tpu_custom_call.1} parent=35 // pred_check
          %p1320 = pneg %p125
        $region38: #{tpu_custom_call.1} parent=35 // pred_check_branch
          %1322 = sbr.rel (%p1320) target = $region40
        $region39: #{tpu_custom_call.1} parent=35 // pred_region
          %s1324 = ssub.s32 384, 384
          %1325 = vsyncadd %s1316, %s1324
          %s1326 = smul.addr %s18, 3
          %s1327 = smul.addr %s1326, 128
          %s1328 = scalar_lea.hbm %s4, %s1327
          %s1330 = sshll.u32 %s1319, 4
          %s1331 = int_to_ptr.vmem [resolvable:$true] %s1330
          %1333 = dma.vmem_to_hbm [thread:$0]  %s1331, 384, %s1328, %s1316
        $region40: #{tpu_custom_call.1} parent=35 // pred_fallthru
          _
      $region36: #{tpu_custom_call.1} parent=5 // pred_fallthru
        _
      %p1334 = scmp.le.s32.totalorder 2, %s13
      // Predicated region
      $region41: #{tpu_custom_call.1} parent=5 // pred_check
        %p1335 = pneg %p1334
      $region42: #{tpu_custom_call.1} parent=5 // pred_check_branch
        %1337 = sbr.rel (%p1335) target = $region44
      $region43: #{tpu_custom_call.1} parent=5 // pred_region
        %s1338 = ssub.s32 %s13, 2
        // Predicated region
        $region45: #{tpu_custom_call.1} parent=43 // pred_check
          %p1339 = pneg %p131
        $region46: #{tpu_custom_call.1} parent=43 // pred_check_branch
          %1341 = sbr.rel (%p1339) target = $region48
        $region47: #{tpu_custom_call.1} parent=43 // pred_region
          %s1342 = sand.u32 %s116, 1
          %s1343 = scalar_lea.sflag [#allocation3], %s1342
          %s1344 = sand.u32 %s116, 1
          %s1345 = smul.addr %s1344, 24
          %s1346 = scalar_lea.vmem [#allocation2], %s1345
          %1347 = dma.done %s1343, 384
        $region48: #{tpu_custom_call.1} parent=43 // pred_fallthru
          _
      $region44: #{tpu_custom_call.1} parent=5 // pred_fallthru
        _
    $region6: #{tpu_custom_call.1} parent=1 // loop_footer
      %s17 = sadd.s32 1, %s13
    $region7: #{tpu_custom_call.1} parent=1 // loop_footer_branch
      %12 = sbr.rel target = $region3
    $region8: #{tpu_custom_call.1} parent=1 // loop_exit
      _
    %1348 = vsyncpa [#allocation3], 1
    %s1349 = scalar_lea.sflag [#allocation3], 1
    %1350 = vsyncpa %s1349, 1

</llo_original>
